<compile_context>
chip_gen: v6e
topology: v6e:2x2x1
jax: 0.10.0
libtpu: 0.0.40
codegen_flags: <defaults>
</compile_context>

<pallas_src>
import jax
import jax.numpy as jnp
from jax.experimental import pallas as pl
from jax.experimental.pallas import tpu as pltpu


def _abs_norm_kernel(x_ref, scale_ref, bias_ref, o_ref):
    # Elementwise on the VPU; (1, ft) params broadcast across the batch tile.
    o_ref[...] = x_ref[...] * scale_ref[...] + bias_ref[...]


def _choose_tiles(batch, features, itemsize, target_block_bytes=4 << 20):
    """Pick (batch_tile, feature_tile, padded_batch) targeting ~4 MiB blocks."""
    # Feature tile: keep the full feature dim unless it is wide and
    # 128-aligned, in which case tile it with a large multiple of 128.
    if features % 128 == 0 and features > 2048:
        ft = 128
        for cand in range(2048, 127, -128):
            if features % cand == 0:
                ft = cand
                break
    else:
        # Full feature dim as a single block (exempt from the 128 rule).
        ft = features

    # Batch tile: enough rows to reach the target block size, multiple of 8.
    rows = max(8, target_block_bytes // max(1, ft * itemsize))
    rows = max(8, int(rows) - int(rows) % 8)

    if rows >= batch:
        # One block covers the whole batch (full-dim block is always legal).
        return batch, ft, batch

    bt = rows
    padded_batch = pl.cdiv(batch, bt) * bt
    return bt, ft, padded_batch


def evaluating_absolute_norm(x, means, inv_std):
    """Pallas TPU implementation of EvaluatingAbsoluteNormLayer.forward.

    x:        [batch, features]  float32
    means:    [features]         float32
    inv_std:  [features]         float32
    returns:  [batch, features]  float32
    """
    batch, features = x.shape
    assert means.shape == (features,)
    assert inv_std.shape == (features,)

    itemsize = jnp.dtype(x.dtype).itemsize
    bt, ft, padded_batch = _choose_tiles(batch, features, itemsize)

    # Pad batch (with zeros) if it does not divide evenly into batch tiles.
    x_in = x
    if padded_batch != batch:
        x_in = jnp.pad(x, ((0, padded_batch - batch), (0, 0)))

    # Precompute fused affine params: out = x * scale + bias.
    scale_2d = inv_std.reshape(1, features).astype(x.dtype)
    bias_2d = (-means * inv_std).reshape(1, features).astype(x.dtype)

    grid = (padded_batch // bt, features // ft)

    # Size the scoped VMEM limit to the double-buffered working set
    # (x block + out block, plus the two (1, ft) param rows), with headroom.
    block_bytes = bt * ft * itemsize
    param_bytes = ft * itemsize
    needed = 2 * (2 * block_bytes) + 2 * (2 * param_bytes)
    vmem_limit = int(min(max(needed + (8 << 20), 32 << 20), 56 << 20))

    out = pl.pallas_call(
        _abs_norm_kernel,
        out_shape=jax.ShapeDtypeStruct((padded_batch, features), x.dtype),
        grid_spec=pl.GridSpec(
            grid=grid,
            in_specs=[
                pl.BlockSpec((bt, ft), lambda i, j: (i, j)),
                pl.BlockSpec((1, ft), lambda i, j: (0, j)),
                pl.BlockSpec((1, ft), lambda i, j: (0, j)),
            ],
            out_specs=pl.BlockSpec((bt, ft), lambda i, j: (i, j)),
        ),
        compiler_params=pltpu.CompilerParams(
            dimension_semantics=("parallel", "parallel"),
            vmem_limit_bytes=vmem_limit,
        ),
    )(x_in, scale_2d, bias_2d)

    if padded_batch != batch:
        out = out[:batch]
    return out


if __name__ == "__main__":
    key = jax.random.PRNGKey(0)
    k_x, k_m, k_s, k_x2 = jax.random.split(key, 4)

    # Small, module-consistent shapes: (batch, features).
    batch, features = 16, 128
    x = jax.random.normal(k_x, (batch, features), dtype=jnp.float32)
    means = jax.random.normal(k_m, (features,), dtype=jnp.float32)
    inv_std = 1.0 / (0.5 + jax.nn.softplus(
        jax.random.normal(k_s, (features,), dtype=jnp.float32)))

    out = jax.block_until_ready(evaluating_absolute_norm(x, means, inv_std))
    ref = (x - means[None, :]) * inv_std[None, :]
    assert out.shape == ref.shape and out.dtype == ref.dtype
    assert jnp.allclose(out, ref, atol=1e-5, rtol=1e-5)

    # Robustness check: batch not a multiple of 8 (exercises full-dim block path).
    batch2 = 10
    x2 = jax.random.normal(k_x2, (batch2, features), dtype=jnp.float32)
    out2 = jax.block_until_ready(evaluating_absolute_norm(x2, means, inv_std))
    ref2 = (x2 - means[None, :]) * inv_std[None, :]
    assert jnp.allclose(out2, ref2, atol=1e-5, rtol=1e-5)

    print("KERNEL_OK")
</pallas_src>

<mosaic_0001>
module attributes {stable_mosaic.version = 11 : i64} {
  func.func @_abs_norm_kernel(%arg0: i32, %arg1: i32, %arg2: memref<16x128xf32, #tpu.memory_space<vmem>>, %arg3: memref<1x128xf32, #tpu.memory_space<vmem>>, %arg4: memref<1x128xf32, #tpu.memory_space<vmem>>, %arg5: memref<16x128xf32, #tpu.memory_space<vmem>>) attributes {dimension_semantics = [#tpu.dimension_semantics<parallel>, #tpu.dimension_semantics<parallel>], iteration_bounds = array<i64: 1, 1>, scalar_prefetch = 0 : i64, scratch_operands = 0 : i64, tpu.core_type = #tpu.core_type<tc>, window_params = [{transform_indices = @transform_0, window_bounds = array<i64: 16, 128>}, {transform_indices = @transform_1, window_bounds = array<i64: 1, 128>}, {transform_indices = @transform_2, window_bounds = array<i64: 1, 128>}, {transform_indices = @transform_3, window_bounds = array<i64: 16, 128>}]} {
    %c0 = arith.constant 0 : index
    %c0_0 = arith.constant 0 : index
    %0 = vector.load %arg2[%c0, %c0_0] : memref<16x128xf32, #tpu.memory_space<vmem>>, vector<16x128xf32>
    %c0_1 = arith.constant 0 : index
    %c0_2 = arith.constant 0 : index
    %1 = vector.load %arg3[%c0_1, %c0_2] : memref<1x128xf32, #tpu.memory_space<vmem>>, vector<1x128xf32>
    %2 = vector.broadcast %1 : vector<1x128xf32> to vector<16x128xf32>
    %3 = arith.mulf %0, %2 : vector<16x128xf32>
    %c0_3 = arith.constant 0 : index
    %c0_4 = arith.constant 0 : index
    %4 = vector.load %arg4[%c0_3, %c0_4] : memref<1x128xf32, #tpu.memory_space<vmem>>, vector<1x128xf32>
    %5 = vector.broadcast %4 : vector<1x128xf32> to vector<16x128xf32>
    %6 = arith.addf %3, %5 : vector<16x128xf32>
    %c0_5 = arith.constant 0 : index
    %c0_6 = arith.constant 0 : index
    %7 = vector.load %arg5[%c0_5, %c0_6] : memref<16x128xf32, #tpu.memory_space<vmem>>, vector<16x128xf32>
    tpu.vector_store %arg5[%c0_5, %c0_6], %6 {strides = array<i32>} : memref<16x128xf32, #tpu.memory_space<vmem>>, vector<16x128xf32>,
    return
  }
  func.func @transform_0(%arg0: i32, %arg1: i32) -> (i32, i32) {
    %c0_i32 = arith.constant 0 : i32
    return %arg0, %arg1 : i32, i32
  }
  func.func @transform_1(%arg0: i32, %arg1: i32) -> (i32, i32) {
    %c0_i32 = arith.constant 0 : i32
    %c0_i32_0 = arith.constant 0 : i32
    return %c0_i32, %arg1 : i32, i32
  }
  func.func @transform_2(%arg0: i32, %arg1: i32) -> (i32, i32) {
    %c0_i32 = arith.constant 0 : i32
    %c0_i32_0 = arith.constant 0 : i32
    return %c0_i32, %arg1 : i32, i32
  }
  func.func @transform_3(%arg0: i32, %arg1: i32) -> (i32, i32) {
    %c0_i32 = arith.constant 0 : i32
    return %arg0, %arg1 : i32, i32
  }
}

</mosaic_0001>

<llo_original>
// kernel: tpu_custom_call.1
$region0: #{tpu_custom_call.1}
  #allocation0 [shape = 'u32[]', space=smem, size = 0x4, offset = 0x4, fixed_abs, tag = 'smem constant byte address 0x4 - core index']
  #allocation1 [shape = 'u32[144,128]{1,0:T(1,128)}', space=vmem, size = 0x12000, scoped, tag = 'internal scratch']
  %s0 = inlined_call_operand.hbm [shape: f32[16,128], index: 0, kind: input, shape index: {}]
  %s1 = inlined_call_operand.vmem [shape: f32[1,128], index: 1, kind: input, shape index: {}]
  %s2 = inlined_call_operand.vmem [shape: f32[1,128], index: 2, kind: input, shape index: {}]
  %s3 = inlined_call_operand.hbm [shape: f32[16,128], index: 3, kind: output, shape index: {}]
  %s4 = sld [smem:[#allocation0]]
  $region26: #{tpu_custom_call.1} parent=0
    _
  %s6 = ssub.s32 1, %s4
  %s7 = scalar_select 0, %s6, %s4
  $region1: #{tpu_custom_call.1} parent=0
    #allocation2 [shape = 'u8[8192]{0}', space=vmem, size = 0x2000, scoped, tag = 'input window, operand 0, single buffered']
    #allocation3 [shape = 's32[1]{0}', space=sflag, size = 0x4, scoped, tag = 'scoped memory for tpu_custom_call.1']
    #allocation4 [shape = 's32[1]{0}', space=sflag, size = 0x4, scoped, tag = 'scoped memory for tpu_custom_call.1']
    #allocation5 [shape = 'u8[8192]{0}', space=vmem, size = 0x2000, scoped, tag = 'output window, operand 0, single buffered']
    %8 = vsyncpa [#allocation3], 0
    %9 = vsyncpa [#allocation4], 0
    // Predicated region
    $region2: #{tpu_custom_call.1} parent=1 // pred_check
      _
    $region3: #{tpu_custom_call.1} parent=1 // pred_check_branch
      %11 = sbr.rel (0) target = $region5
    $region4: #{tpu_custom_call.1} parent=1 // pred_region
      %s13 = ssub.s32 256, 256
      %14 = vsyncadd [#allocation3], %s13
      %s15 = sshll.u32 [#allocation2], 4
      %s16 = int_to_ptr.vmem [resolvable:$true] %s15
      %21 = dma.hbm_to_vmem [thread:$0]  %s0, 256, %s16, [#allocation3], 128, 128, 8
    $region5: #{tpu_custom_call.1} parent=1 // pred_fallthru
      _
    // Predicated region
    $region6: #{tpu_custom_call.1} parent=1 // pred_check
      _
    $region7: #{tpu_custom_call.1} parent=1 // pred_check_branch
      %23 = sbr.rel (0) target = $region9
    $region8: #{tpu_custom_call.1} parent=1 // pred_region
      _
    $region9: #{tpu_custom_call.1} parent=1 // pred_fallthru
      _
    // Predicated region
    $region10: #{tpu_custom_call.1} parent=1 // pred_check
      _
    $region11: #{tpu_custom_call.1} parent=1 // pred_check_branch
      %25 = sbr.rel (0) target = $region13
    $region12: #{tpu_custom_call.1} parent=1 // pred_region
      _
    $region13: #{tpu_custom_call.1} parent=1 // pred_fallthru
      _
    // Predicated region
    $region14: #{tpu_custom_call.1} parent=1 // pred_check
      _
    $region15: #{tpu_custom_call.1} parent=1 // pred_check_branch
      %27 = sbr.rel (0) target = $region17
    $region16: #{tpu_custom_call.1} parent=1 // pred_region
      %28 = dma.done [#allocation3], 256
    $region17: #{tpu_custom_call.1} parent=1 // pred_fallthru
      _
    %v29 = vld [vmem:[#allocation2] sm:$0xff]
    %v30 = vld [vmem:[#allocation2 + $0x8] sm:$0xff]
    %v31 = vld [vmem:[%s1] sm:$0x1]
    %v33 = vlaneseq
    %v34 = vshrl.u32 %v33, 7
    %v35 = vsub.s32 0, %v34
    %v36 = vrot.slane %v31, %v35
    %v38 = vmul.f32 %v29, %v36
    %v39 = vmul.f32 %v30, %v36
    %v40 = vld [vmem:[%s2] sm:$0x1]
    %v42 = vlaneseq
    %v43 = vshrl.u32 %v42, 7
    %v44 = vsub.s32 0, %v43
    %v45 = vrot.slane %v40, %v44
    %v47 = vadd.f32 %v38, %v45
    %v48 = vadd.f32 %v39, %v45
    %49 = vst [vmem:[#allocation5] sm:$0xff] %v47
    %50 = vst [vmem:[#allocation5 + $0x8] sm:$0xff] %v48
    // Predicated region
    $region18: #{tpu_custom_call.1} parent=1 // pred_check
      _
    $region19: #{tpu_custom_call.1} parent=1 // pred_check_branch
      %52 = sbr.rel (0) target = $region21
    $region20: #{tpu_custom_call.1} parent=1 // pred_region
      %s54 = ssub.s32 256, 256
      %55 = vsyncadd [#allocation4], %s54
      %s56 = sshll.u32 [#allocation5], 4
      %s57 = int_to_ptr.vmem [resolvable:$true] %s56
      %62 = dma.vmem_to_hbm [thread:$0]  %s57, 256, %s3, [#allocation4], 128, 128, 8
    $region21: #{tpu_custom_call.1} parent=1 // pred_fallthru
      _
    // Predicated region
    $region22: #{tpu_custom_call.1} parent=1 // pred_check
      _
    $region23: #{tpu_custom_call.1} parent=1 // pred_check_branch
      %64 = sbr.rel (0) target = $region25
    $region24: #{tpu_custom_call.1} parent=1 // pred_region
      %65 = dma.done [#allocation4], 256
    $region25: #{tpu_custom_call.1} parent=1 // pred_fallthru
      _
    %66 = vsyncpa [#allocation3], 1
    %67 = vsyncpa [#allocation4], 1

</llo_original>
